<compile_context>
chip_gen: v6e
topology: v6e:2x2x1
jax: 0.10.0
libtpu: 0.0.40
codegen_flags: <defaults>
</compile_context>

<pallas_src>
import functools

import jax
import jax.numpy as jnp
from jax.experimental import pallas as pl
from jax.experimental.pallas import tpu as pltpu


def _leaky_dorelu_kernel(x_ref, o_ref, *, inv_gamma):
    x = x_ref[...]
    # x > 1 branch, else x; the 0 <= x <= 1 case falls out of the "else".
    y = jnp.where(x > 1, 1 + (x - 1) * inv_gamma, x)
    # x < 0 branch overrides.
    y = jnp.where(x < 0, x * inv_gamma, y)
    o_ref[...] = y.astype(o_ref.dtype)


def leaky_dorelu(x, gamma, *, lane=1024, max_tile_rows=512):
    """Elementwise LeakyDoReLU for any shape/rank. Lane-dense tiled Pallas kernel."""
    orig_shape = x.shape
    dtype = x.dtype
    total = x.size

    # Sublane quantum depends on dtype packing: 8 rows/vreg for 4-byte,
    # 16 for 2-byte (bf16), 32 for 1-byte dtypes.
    itemsize = jnp.dtype(dtype).itemsize
    sublane = max(8, 32 // itemsize)

    # Flatten and pad so the slab is (rows, lane) with rows a multiple of the
    # sublane quantum. Padding is at most sublane*lane elements (tiny).
    row_quantum = sublane * lane
    padded_total = ((total + row_quantum - 1) // row_quantum) * row_quantum
    flat = x.reshape(-1)
    if padded_total != total:
        flat = jnp.pad(flat, (0, padded_total - total))
    rows = padded_total // lane
    x2 = flat.reshape(rows, lane)

    # Tile rows: big blocks (<= max_tile_rows) but never a single collapsed
    # block for large inputs; split into >=2 grid steps when rows allow so
    # both v7x TensorCores are fed.
    tile_rows = min(max_tile_rows, rows)
    if tile_rows == rows and rows >= 2 * sublane:
        half = (rows + 1) // 2
        tile_rows = ((half + sublane - 1) // sublane) * sublane
    num_blocks = (rows + tile_rows - 1) // tile_rows  # Pallas masks the tail block.

    kernel = functools.partial(_leaky_dorelu_kernel, inv_gamma=1.0 / float(gamma))

    out2 = pl.pallas_call(
        kernel,
        out_shape=jax.ShapeDtypeStruct((rows, lane), dtype),
        grid_spec=pltpu.PrefetchScalarGridSpec(
            num_scalar_prefetch=0,
            grid=(num_blocks,),
            in_specs=[pl.BlockSpec((tile_rows, lane), lambda i: (i, 0))],
            out_specs=pl.BlockSpec((tile_rows, lane), lambda i: (i, 0)),
        ),
        compiler_params=pltpu.CompilerParams(
            dimension_semantics=("parallel",),
        ),
    )(x2)

    out_flat = out2.reshape(-1)
    if padded_total != total:
        out_flat = out_flat[:total]
    return out_flat.reshape(orig_shape)


def leaky_dorelu_ref(x, gamma):
    """Pure-JAX reference mirroring the PyTorch forward exactly."""
    y = jnp.where(x > 1, 1 + (x - 1) / gamma, x)
    y = jnp.where((x >= 0) & (x <= 1), x, y)
    y = jnp.where(x < 0, x / gamma, y)
    return y


if __name__ == "__main__":
    gamma = 4.0  # module hyperparameter (no learnable weights)
    key = jax.random.PRNGKey(0)
    # Small NCHW input, scaled so all three branches (x<0, [0,1], x>1) occur.
    x = jax.random.normal(key, (2, 4, 16, 16), dtype=jnp.float32) * 2.0

    out = leaky_dorelu(x, gamma)
    out = jax.block_until_ready(out)

    ref = leaky_dorelu_ref(x, gamma)
    assert out.shape == x.shape and out.dtype == x.dtype
    assert jnp.allclose(out, ref, atol=1e-6, rtol=1e-6), "mismatch vs reference"

    print("KERNEL_OK")
</pallas_src>

<mosaic_0001>
module attributes {stable_mosaic.version = 11 : i64} {
  func.func @_leaky_dorelu_kernel(%arg0: i32, %arg1: memref<8x1024xf32, #tpu.memory_space<vmem>>, %arg2: memref<8x1024xf32, #tpu.memory_space<vmem>>) attributes {dimension_semantics = [#tpu.dimension_semantics<parallel>], iteration_bounds = array<i64: 1>, scalar_prefetch = 0 : i64, scratch_operands = 0 : i64, tpu.core_type = #tpu.core_type<tc>, window_params = [{transform_indices = @transform_0, window_bounds = array<i64: 8, 1024>}, {transform_indices = @transform_1, window_bounds = array<i64: 8, 1024>}]} {
    %c0 = arith.constant 0 : index
    %c0_0 = arith.constant 0 : index
    %0 = vector.load %arg1[%c0, %c0_0] : memref<8x1024xf32, #tpu.memory_space<vmem>>, vector<8x1024xf32>
    %cst = arith.constant 1.000000e+00 : f32
    %1 = vector.broadcast %cst : f32 to vector<8x1024xf32>
    %2 = arith.cmpf ogt, %0, %1 : vector<8x1024xf32>
    %cst_1 = arith.constant 1.000000e+00 : f32
    %3 = vector.broadcast %cst_1 : f32 to vector<8x1024xf32>
    %4 = arith.subf %0, %3 : vector<8x1024xf32>
    %cst_2 = arith.constant 2.500000e-01 : f32
    %5 = vector.broadcast %cst_2 : f32 to vector<8x1024xf32>
    %6 = arith.mulf %4, %5 : vector<8x1024xf32>
    %cst_3 = arith.constant 1.000000e+00 : f32
    %7 = vector.broadcast %cst_3 : f32 to vector<8x1024xf32>
    %8 = arith.addf %7, %6 : vector<8x1024xf32>
    %9 = arith.select %2, %8, %0 : vector<8x1024xi1>, vector<8x1024xf32>
    %cst_4 = arith.constant 0.000000e+00 : f32
    %10 = vector.broadcast %cst_4 : f32 to vector<8x1024xf32>
    %11 = arith.cmpf olt, %0, %10 : vector<8x1024xf32>
    %cst_5 = arith.constant 2.500000e-01 : f32
    %12 = vector.broadcast %cst_5 : f32 to vector<8x1024xf32>
    %13 = arith.mulf %0, %12 : vector<8x1024xf32>
    %14 = arith.select %11, %13, %9 : vector<8x1024xi1>, vector<8x1024xf32>
    %c0_6 = arith.constant 0 : index
    %c0_7 = arith.constant 0 : index
    %15 = vector.load %arg2[%c0_6, %c0_7] : memref<8x1024xf32, #tpu.memory_space<vmem>>, vector<8x1024xf32>
    tpu.vector_store %arg2[%c0_6, %c0_7], %14 {strides = array<i32>} : memref<8x1024xf32, #tpu.memory_space<vmem>>, vector<8x1024xf32>,
    return
  }
  func.func @transform_0(%arg0: i32) -> (i32, i32) {
    %c0_i32 = arith.constant 0 : i32
    %c0_i32_0 = arith.constant 0 : i32
    return %arg0, %c0_i32 : i32, i32
  }
  func.func @transform_1(%arg0: i32) -> (i32, i32) {
    %c0_i32 = arith.constant 0 : i32
    %c0_i32_0 = arith.constant 0 : i32
    return %arg0, %c0_i32 : i32, i32
  }
}

</mosaic_0001>

<llo_original>
// kernel: tpu_custom_call.1
$region0: #{tpu_custom_call.1}
  #allocation0 [shape = 'u32[]', space=smem, size = 0x4, offset = 0x4, fixed_abs, tag = 'smem constant byte address 0x4 - core index']
  #allocation1 [shape = 'u32[144,128]{1,0:T(1,128)}', space=vmem, size = 0x12000, scoped, tag = 'internal scratch']
  %s0 = inlined_call_operand.hbm [shape: f32[8,1024], index: 0, kind: input, shape index: {}]
  %s1 = inlined_call_operand.hbm [shape: f32[8,1024], index: 1, kind: output, shape index: {}]
  %s2 = sld [smem:[#allocation0]]
  $region18: #{tpu_custom_call.1} parent=0
    _
  %s4 = ssub.s32 1, %s2
  %s5 = scalar_select 0, %s4, %s2
  $region1: #{tpu_custom_call.1} parent=0
    #allocation2 [shape = 'u8[32768]{0}', space=vmem, size = 0x8000, scoped, tag = 'input window, operand 0, single buffered']
    #allocation3 [shape = 's32[1]{0}', space=sflag, size = 0x4, scoped, tag = 'scoped memory for tpu_custom_call.1']
    #allocation4 [shape = 's32[1]{0}', space=sflag, size = 0x4, scoped, tag = 'scoped memory for tpu_custom_call.1']
    #allocation5 [shape = 'u8[32768]{0}', space=vmem, size = 0x8000, scoped, tag = 'output window, operand 0, single buffered']
    %6 = vsyncpa [#allocation3], 0
    %7 = vsyncpa [#allocation4], 0
    // Predicated region
    $region2: #{tpu_custom_call.1} parent=1 // pred_check
      _
    $region3: #{tpu_custom_call.1} parent=1 // pred_check_branch
      %9 = sbr.rel (0) target = $region5
    $region4: #{tpu_custom_call.1} parent=1 // pred_region
      %s11 = ssub.s32 1024, 1024
      %12 = vsyncadd [#allocation3], %s11
      %s14 = sshll.u32 [#allocation2], 4
      %s15 = int_to_ptr.vmem [resolvable:$true] %s14
      %17 = dma.hbm_to_vmem [thread:$0]  %s0, 1024, %s15, [#allocation3]
    $region5: #{tpu_custom_call.1} parent=1 // pred_fallthru
      _
    // Predicated region
    $region6: #{tpu_custom_call.1} parent=1 // pred_check
      _
    $region7: #{tpu_custom_call.1} parent=1 // pred_check_branch
      %19 = sbr.rel (0) target = $region9
    $region8: #{tpu_custom_call.1} parent=1 // pred_region
      %20 = dma.done [#allocation3], 1024
    $region9: #{tpu_custom_call.1} parent=1 // pred_fallthru
      _
    %v21 = vld [vmem:[#allocation2] sm:$0xff]
    %v22 = vld [vmem:[#allocation2 + $0x8] sm:$0xff]
    %v23 = vld [vmem:[#allocation2 + $0x10] sm:$0xff]
    %v24 = vld [vmem:[#allocation2 + $0x18] sm:$0xff]
    %v25 = vld [vmem:[#allocation2 + $0x20] sm:$0xff]
    %v26 = vld [vmem:[#allocation2 + $0x28] sm:$0xff]
    %v27 = vld [vmem:[#allocation2 + $0x30] sm:$0xff]
    %v28 = vld [vmem:[#allocation2 + $0x38] sm:$0xff]
    %vm29 = vcmp.gt.f32.partialorder %v21, 1.0
    %vm30 = vcmp.gt.f32.partialorder %v22, 1.0
    %vm31 = vcmp.gt.f32.partialorder %v23, 1.0
    %vm32 = vcmp.gt.f32.partialorder %v24, 1.0
    %vm33 = vcmp.gt.f32.partialorder %v25, 1.0
    %vm34 = vcmp.gt.f32.partialorder %v26, 1.0
    %vm35 = vcmp.gt.f32.partialorder %v27, 1.0
    %vm36 = vcmp.gt.f32.partialorder %v28, 1.0
    %v37 = vsub.f32 %v21, 1.0
    %v38 = vsub.f32 %v22, 1.0
    %v39 = vsub.f32 %v23, 1.0
    %v40 = vsub.f32 %v24, 1.0
    %v41 = vsub.f32 %v25, 1.0
    %v42 = vsub.f32 %v26, 1.0
    %v43 = vsub.f32 %v27, 1.0
    %v44 = vsub.f32 %v28, 1.0
    %v45 = vmul.f32 %v37, 0.25
    %v46 = vmul.f32 %v38, 0.25
    %v47 = vmul.f32 %v39, 0.25
    %v48 = vmul.f32 %v40, 0.25
    %v49 = vmul.f32 %v41, 0.25
    %v50 = vmul.f32 %v42, 0.25
    %v51 = vmul.f32 %v43, 0.25
    %v52 = vmul.f32 %v44, 0.25
    %v53 = vadd.f32 %v45, 1.0
    %v54 = vadd.f32 %v46, 1.0
    %v55 = vadd.f32 %v47, 1.0
    %v56 = vadd.f32 %v48, 1.0
    %v57 = vadd.f32 %v49, 1.0
    %v58 = vadd.f32 %v50, 1.0
    %v59 = vadd.f32 %v51, 1.0
    %v60 = vadd.f32 %v52, 1.0
    %v61 = vsel %vm29, %v53, %v21
    %v62 = vsel %vm30, %v54, %v22
    %v63 = vsel %vm31, %v55, %v23
    %v64 = vsel %vm32, %v56, %v24
    %v65 = vsel %vm33, %v57, %v25
    %v66 = vsel %vm34, %v58, %v26
    %v67 = vsel %vm35, %v59, %v27
    %v68 = vsel %vm36, %v60, %v28
    %vm69 = vcmp.lt.f32.partialorder %v21, 0.0
    %vm70 = vcmp.lt.f32.partialorder %v22, 0.0
    %vm71 = vcmp.lt.f32.partialorder %v23, 0.0
    %vm72 = vcmp.lt.f32.partialorder %v24, 0.0
    %vm73 = vcmp.lt.f32.partialorder %v25, 0.0
    %vm74 = vcmp.lt.f32.partialorder %v26, 0.0
    %vm75 = vcmp.lt.f32.partialorder %v27, 0.0
    %vm76 = vcmp.lt.f32.partialorder %v28, 0.0
    %v77 = vmul.f32 %v21, 0.25
    %v78 = vmul.f32 %v22, 0.25
    %v79 = vmul.f32 %v23, 0.25
    %v80 = vmul.f32 %v24, 0.25
    %v81 = vmul.f32 %v25, 0.25
    %v82 = vmul.f32 %v26, 0.25
    %v83 = vmul.f32 %v27, 0.25
    %v84 = vmul.f32 %v28, 0.25
    %v85 = vsel %vm69, %v77, %v61
    %v86 = vsel %vm70, %v78, %v62
    %v87 = vsel %vm71, %v79, %v63
    %v88 = vsel %vm72, %v80, %v64
    %v89 = vsel %vm73, %v81, %v65
    %v90 = vsel %vm74, %v82, %v66
    %v91 = vsel %vm75, %v83, %v67
    %v92 = vsel %vm76, %v84, %v68
    %93 = vst [vmem:[#allocation5] sm:$0xff] %v85
    %94 = vst [vmem:[#allocation5 + $0x8] sm:$0xff] %v86
    %95 = vst [vmem:[#allocation5 + $0x10] sm:$0xff] %v87
    %96 = vst [vmem:[#allocation5 + $0x18] sm:$0xff] %v88
    %97 = vst [vmem:[#allocation5 + $0x20] sm:$0xff] %v89
    %98 = vst [vmem:[#allocation5 + $0x28] sm:$0xff] %v90
    %99 = vst [vmem:[#allocation5 + $0x30] sm:$0xff] %v91
    %100 = vst [vmem:[#allocation5 + $0x38] sm:$0xff] %v92
    // Predicated region
    $region10: #{tpu_custom_call.1} parent=1 // pred_check
      _
    $region11: #{tpu_custom_call.1} parent=1 // pred_check_branch
      %102 = sbr.rel (0) target = $region13
    $region12: #{tpu_custom_call.1} parent=1 // pred_region
      %s104 = ssub.s32 1024, 1024
      %105 = vsyncadd [#allocation4], %s104
      %s107 = sshll.u32 [#allocation5], 4
      %s108 = int_to_ptr.vmem [resolvable:$true] %s107
      %110 = dma.vmem_to_hbm [thread:$0]  %s108, 1024, %s1, [#allocation4]
    $region13: #{tpu_custom_call.1} parent=1 // pred_fallthru
      _
    // Predicated region
    $region14: #{tpu_custom_call.1} parent=1 // pred_check
      _
    $region15: #{tpu_custom_call.1} parent=1 // pred_check_branch
      %112 = sbr.rel (0) target = $region17
    $region16: #{tpu_custom_call.1} parent=1 // pred_region
      %113 = dma.done [#allocation4], 1024
    $region17: #{tpu_custom_call.1} parent=1 // pred_fallthru
      _
    %114 = vsyncpa [#allocation3], 1
    %115 = vsyncpa [#allocation4], 1

</llo_original>
